<compile_context>
chip_gen: v5e
topology: v5e:2x2
jax: 0.10.0
libtpu: 0.0.40
codegen_flags: <defaults>
</compile_context>

<pallas_src>
import functools

import jax
import jax.numpy as jnp
from jax.experimental import pallas as pl
from jax.experimental.pallas import tpu as pltpu


def _round_up(x, m):
    return (x + m - 1) // m * m


def _make_mlp_kernel(num_layers, compute_dtype):
    """Fused kernel: all linear layers + interleaved ReLU in one body."""

    def kernel(*refs):
        x_ref = refs[0]
        w_refs = refs[1:1 + num_layers]
        b_refs = refs[1 + num_layers:1 + 2 * num_layers]
        o_ref = refs[-1]

        h = x_ref[...]                                  # native dtype operand
        for i in range(num_layers):
            # (TM, in_i) @ (in_i, out_i) on the MXU, f32 accumulation.
            acc = jnp.dot(h, w_refs[i][...],
                          preferred_element_type=jnp.float32)
            acc = acc + b_refs[i][...].astype(jnp.float32)   # bias is (1, out_i)
            if i < num_layers - 1:
                acc = jnp.maximum(acc, 0.0)             # ReLU on all but last
                h = acc.astype(compute_dtype)           # back to MXU dtype
            else:
                h = acc
        o_ref[...] = h.astype(o_ref.dtype)

    return kernel


def mlp_forward(x, weights, biases, *, tm=512):
    """Fused MLP forward.

    x       : (..., input_dim)
    weights : list of (in_i, out_i) arrays (PyTorch weight.T)
    biases  : list of (out_i,) or (1, out_i) arrays
    """
    num_layers = len(weights)
    in_dim = x.shape[-1]
    out_dim = weights[-1].shape[1]
    lead_shape = x.shape[:-1]

    x2 = x.reshape(-1, in_dim)
    m = x2.shape[0]

    # --- lane-align feature dims, sublane/tile-align rows -------------------
    dims = [in_dim] + [w.shape[1] for w in weights]
    pdims = [_round_up(d, 128) for d in dims]           # lane-dense everywhere

    tm_eff = _round_up(min(tm, _round_up(m, 8)), 8)     # big tile, capped by M
    m_pad = _round_up(m, tm_eff)                        # no divisibility assert

    compute_dtype = weights[0].dtype

    # --- zero-pad inputs and parameters (exact for Linear+ReLU) -------------
    xp = jnp.zeros((m_pad, pdims[0]), x.dtype).at[:m, :in_dim].set(x2)
    wps, bps = [], []
    for i, (w, b) in enumerate(zip(weights, biases)):
        wp = jnp.zeros((pdims[i], pdims[i + 1]), w.dtype)
        wp = wp.at[:w.shape[0], :w.shape[1]].set(w)
        b2 = b.reshape(1, -1)
        bp = jnp.zeros((1, pdims[i + 1]), b2.dtype).at[:, :b2.shape[1]].set(b2)
        wps.append(wp)
        bps.append(bp)

    # --- specs ----------------------------------------------------------------
    grid = (m_pad // tm_eff,)
    in_specs = [pl.BlockSpec((tm_eff, pdims[0]), lambda i: (i, 0))]
    for wp in wps:
        in_specs.append(pl.BlockSpec(wp.shape, lambda i: (0, 0)))
    for bp in bps:
        in_specs.append(pl.BlockSpec(bp.shape, lambda i: (0, 0)))
    out_spec = pl.BlockSpec((tm_eff, pdims[-1]), lambda i: (i, 0))

    # --- explicit VMEM budget (v7x-safe: cap at 64 MiB) ----------------------
    isz = jnp.dtype(x.dtype).itemsize
    w_bytes = sum(a.size * jnp.dtype(a.dtype).itemsize for a in wps + bps)
    tile_bytes = 2 * tm_eff * pdims[0] * isz + 2 * tm_eff * pdims[-1] * isz
    interm_bytes = tm_eff * max(pdims) * 4              # f32 activation
    needed = int(1.5 * (2 * w_bytes + tile_bytes + interm_bytes)) + (4 << 20)
    vmem_limit = max(32 << 20, min(64 << 20, needed))

    flops = 2 * m_pad * sum(pdims[i] * pdims[i + 1] for i in range(num_layers))
    bytes_accessed = (xp.size * isz + w_bytes
                      + m_pad * pdims[-1] * isz)
    cost = pl.CostEstimate(flops=flops, transcendentals=0,
                           bytes_accessed=bytes_accessed)

    kernel = _make_mlp_kernel(num_layers, compute_dtype)

    out2 = pl.pallas_call(
        kernel,
        out_shape=jax.ShapeDtypeStruct((m_pad, pdims[-1]), x.dtype),
        grid_spec=pl.GridSpec(
            grid=grid,
            in_specs=in_specs,
            out_specs=out_spec,
        ),
        compiler_params=pltpu.CompilerParams(
            dimension_semantics=("parallel",),
            vmem_limit_bytes=vmem_limit,
        ),
        cost_estimate=cost,
    )(xp, *wps, *bps)

    # slice off row/lane padding and restore leading dims
    return out2[:m, :out_dim].reshape(*lead_shape, out_dim)


def init_mlp_params(key, input_dim, hidden_dim, output_dim, num_layers,
                    dtype=jnp.float32):
    """Deterministic synthetic init matching nn.Linear shapes (stored transposed)."""
    h = [hidden_dim] * (num_layers - 1)
    dims_in = [input_dim] + h
    dims_out = h + [output_dim]
    weights, biases = [], []
    for n, k in zip(dims_in, dims_out):
        key, wk, bk = jax.random.split(key, 3)
        bound = 1.0 / jnp.sqrt(jnp.float32(n))
        # PyTorch Linear weight is (out, in); we keep W.T = (in, out).
        w = jax.random.uniform(wk, (n, k), dtype, -bound, bound)
        b = jax.random.uniform(bk, (1, k), dtype, -bound, bound)
        weights.append(w)
        biases.append(b)
    return weights, biases


def mlp_reference(x, weights, biases):
    """Plain-JAX reference mirroring the PyTorch forward exactly."""
    num_layers = len(weights)
    h = x
    for i in range(num_layers):
        h = h @ weights[i] + biases[i][0]
        if i < num_layers - 1:
            h = jax.nn.relu(h)
    return h


if __name__ == "__main__":
    # DETR-style bbox head: 3-layer MLP, small synthetic sizes.
    input_dim, hidden_dim, output_dim, num_layers = 32, 32, 4, 3
    batch, num_queries = 2, 8  # -> 16 rows

    key = jax.random.PRNGKey(0)
    key, xk = jax.random.split(key)
    x = jax.random.normal(xk, (batch, num_queries, input_dim), jnp.float32)

    weights, biases = init_mlp_params(key, input_dim, hidden_dim, output_dim,
                                      num_layers)

    out = mlp_forward(x, weights, biases)
    out = jax.block_until_ready(out)

    ref = mlp_reference(x, weights, biases)
    assert out.shape == (batch, num_queries, output_dim)
    assert jnp.allclose(out, ref, atol=1e-5, rtol=1e-5), "mismatch vs reference"

    print("KERNEL_OK")
</pallas_src>

<mosaic_0001>
module attributes {stable_mosaic.version = 11 : i64} {
  func.func @kernel(%arg0: i32, %arg1: memref<16x128xf32, #tpu.memory_space<vmem>>, %arg2: memref<128x128xf32, #tpu.memory_space<vmem>>, %arg3: memref<128x128xf32, #tpu.memory_space<vmem>>, %arg4: memref<128x128xf32, #tpu.memory_space<vmem>>, %arg5: memref<1x128xf32, #tpu.memory_space<vmem>>, %arg6: memref<1x128xf32, #tpu.memory_space<vmem>>, %arg7: memref<1x128xf32, #tpu.memory_space<vmem>>, %arg8: memref<16x128xf32, #tpu.memory_space<vmem>>) attributes {dimension_semantics = [#tpu.dimension_semantics<parallel>], iteration_bounds = array<i64: 1>, scalar_prefetch = 0 : i64, scratch_operands = 0 : i64, tpu.core_type = #tpu.core_type<tc>, window_params = [{transform_indices = @transform_0, window_bounds = array<i64: 16, 128>}, {pipeline_mode = #tpu.pipeline_mode<synchronous>, transform_indices = @transform_1, window_bounds = array<i64: 128, 128>}, {pipeline_mode = #tpu.pipeline_mode<synchronous>, transform_indices = @transform_2, window_bounds = array<i64: 128, 128>}, {pipeline_mode = #tpu.pipeline_mode<synchronous>, transform_indices = @transform_3, window_bounds = array<i64: 128, 128>}, {pipeline_mode = #tpu.pipeline_mode<synchronous>, transform_indices = @transform_4, window_bounds = array<i64: 1, 128>}, {pipeline_mode = #tpu.pipeline_mode<synchronous>, transform_indices = @transform_5, window_bounds = array<i64: 1, 128>}, {pipeline_mode = #tpu.pipeline_mode<synchronous>, transform_indices = @transform_6, window_bounds = array<i64: 1, 128>}, {transform_indices = @transform_7, window_bounds = array<i64: 16, 128>}]} {
    %c0 = arith.constant 0 : index
    %c0_0 = arith.constant 0 : index
    %0 = vector.load %arg1[%c0, %c0_0] : memref<16x128xf32, #tpu.memory_space<vmem>>, vector<16x128xf32>
    %c0_1 = arith.constant 0 : index
    %c0_2 = arith.constant 0 : index
    %1 = vector.load %arg2[%c0_1, %c0_2] : memref<128x128xf32, #tpu.memory_space<vmem>>, vector<128x128xf32>
    %cst = arith.constant dense<0.000000e+00> : vector<16x128xf32>
    %2 = tpu.matmul %0, %1, %cst {dimension_numbers = #tpu.dot_dimension_numbers<[1], [0], [0], [1], [0, 0, 1, 1], [], []>} : vector<16x128xf32>, vector<128x128xf32>, vector<16x128xf32> -> vector<16x128xf32>
    %c0_3 = arith.constant 0 : index
    %c0_4 = arith.constant 0 : index
    %3 = vector.load %arg5[%c0_3, %c0_4] : memref<1x128xf32, #tpu.memory_space<vmem>>, vector<1x128xf32>
    %4 = vector.broadcast %3 : vector<1x128xf32> to vector<16x128xf32>
    %5 = arith.addf %2, %4 : vector<16x128xf32>
    %cst_5 = arith.constant 0.000000e+00 : f32
    %6 = vector.broadcast %cst_5 : f32 to vector<16x128xf32>
    %7 = arith.maximumf %5, %6 : vector<16x128xf32>
    %c0_6 = arith.constant 0 : index
    %c0_7 = arith.constant 0 : index
    %8 = vector.load %arg3[%c0_6, %c0_7] : memref<128x128xf32, #tpu.memory_space<vmem>>, vector<128x128xf32>
    %cst_8 = arith.constant dense<0.000000e+00> : vector<16x128xf32>
    %9 = tpu.matmul %7, %8, %cst_8 {dimension_numbers = #tpu.dot_dimension_numbers<[1], [0], [0], [1], [0, 0, 1, 1], [], []>} : vector<16x128xf32>, vector<128x128xf32>, vector<16x128xf32> -> vector<16x128xf32>
    %c0_9 = arith.constant 0 : index
    %c0_10 = arith.constant 0 : index
    %10 = vector.load %arg6[%c0_9, %c0_10] : memref<1x128xf32, #tpu.memory_space<vmem>>, vector<1x128xf32>
    %11 = vector.broadcast %10 : vector<1x128xf32> to vector<16x128xf32>
    %12 = arith.addf %9, %11 : vector<16x128xf32>
    %cst_11 = arith.constant 0.000000e+00 : f32
    %13 = vector.broadcast %cst_11 : f32 to vector<16x128xf32>
    %14 = arith.maximumf %12, %13 : vector<16x128xf32>
    %c0_12 = arith.constant 0 : index
    %c0_13 = arith.constant 0 : index
    %15 = vector.load %arg4[%c0_12, %c0_13] : memref<128x128xf32, #tpu.memory_space<vmem>>, vector<128x128xf32>
    %cst_14 = arith.constant dense<0.000000e+00> : vector<16x128xf32>
    %16 = tpu.matmul %14, %15, %cst_14 {dimension_numbers = #tpu.dot_dimension_numbers<[1], [0], [0], [1], [0, 0, 1, 1], [], []>} : vector<16x128xf32>, vector<128x128xf32>, vector<16x128xf32> -> vector<16x128xf32>
    %c0_15 = arith.constant 0 : index
    %c0_16 = arith.constant 0 : index
    %17 = vector.load %arg7[%c0_15, %c0_16] : memref<1x128xf32, #tpu.memory_space<vmem>>, vector<1x128xf32>
    %18 = vector.broadcast %17 : vector<1x128xf32> to vector<16x128xf32>
    %19 = arith.addf %16, %18 : vector<16x128xf32>
    %c0_17 = arith.constant 0 : index
    %c0_18 = arith.constant 0 : index
    %20 = vector.load %arg8[%c0_17, %c0_18] : memref<16x128xf32, #tpu.memory_space<vmem>>, vector<16x128xf32>
    tpu.vector_store %arg8[%c0_17, %c0_18], %19 {strides = array<i32>} : memref<16x128xf32, #tpu.memory_space<vmem>>, vector<16x128xf32>,
    return
  }
  func.func @transform_0(%arg0: i32) -> (i32, i32) {
    %c0_i32 = arith.constant 0 : i32
    %c0_i32_0 = arith.constant 0 : i32
    return %arg0, %c0_i32 : i32, i32
  }
  func.func @transform_1(%arg0: i32) -> (i32, i32) {
    %c0_i32 = arith.constant 0 : i32
    %c0_i32_0 = arith.constant 0 : i32
    %c0_i32_1 = arith.constant 0 : i32
    return %c0_i32, %c0_i32_0 : i32, i32
  }
  func.func @transform_2(%arg0: i32) -> (i32, i32) {
    %c0_i32 = arith.constant 0 : i32
    %c0_i32_0 = arith.constant 0 : i32
    %c0_i32_1 = arith.constant 0 : i32
    return %c0_i32, %c0_i32_0 : i32, i32
  }
  func.func @transform_3(%arg0: i32) -> (i32, i32) {
    %c0_i32 = arith.constant 0 : i32
    %c0_i32_0 = arith.constant 0 : i32
    %c0_i32_1 = arith.constant 0 : i32
    return %c0_i32, %c0_i32_0 : i32, i32
  }
  func.func @transform_4(%arg0: i32) -> (i32, i32) {
    %c0_i32 = arith.constant 0 : i32
    %c0_i32_0 = arith.constant 0 : i32
    %c0_i32_1 = arith.constant 0 : i32
    return %c0_i32, %c0_i32_0 : i32, i32
  }
  func.func @transform_5(%arg0: i32) -> (i32, i32) {
    %c0_i32 = arith.constant 0 : i32
    %c0_i32_0 = arith.constant 0 : i32
    %c0_i32_1 = arith.constant 0 : i32
    return %c0_i32, %c0_i32_0 : i32, i32
  }
  func.func @transform_6(%arg0: i32) -> (i32, i32) {
    %c0_i32 = arith.constant 0 : i32
    %c0_i32_0 = arith.constant 0 : i32
    %c0_i32_1 = arith.constant 0 : i32
    return %c0_i32, %c0_i32_0 : i32, i32
  }
  func.func @transform_7(%arg0: i32) -> (i32, i32) {
    %c0_i32 = arith.constant 0 : i32
    %c0_i32_0 = arith.constant 0 : i32
    return %arg0, %c0_i32 : i32, i32
  }
}

</mosaic_0001>

<llo_original>
// kernel: tpu_custom_call.1
$region0: #{tpu_custom_call.1}
  #allocation0 [shape = 'u32[]', space=smem, size = 0x4, offset = 0x4, fixed_abs, tag = 'smem constant byte address 0x4 - core index']
  #allocation1 [shape = 'u32[72,128]{1,0:T(1,128)}', space=vmem, size = 0x9000, scoped, tag = 'internal scratch']
  %s0 = inlined_call_operand.hbm [shape: f32[16,128], index: 0, kind: input, shape index: {}]
  %s1 = inlined_call_operand.hbm [shape: f32[128,128], index: 1, kind: input, shape index: {}]
  %s2 = inlined_call_operand.hbm [shape: f32[128,128], index: 2, kind: input, shape index: {}]
  %s3 = inlined_call_operand.hbm [shape: f32[128,128], index: 3, kind: input, shape index: {}]
  %s4 = inlined_call_operand.vmem [shape: f32[1,128], index: 4, kind: input, shape index: {}]
  %s5 = inlined_call_operand.vmem [shape: f32[1,128], index: 5, kind: input, shape index: {}]
  %s6 = inlined_call_operand.vmem [shape: f32[1,128], index: 6, kind: input, shape index: {}]
  %s7 = inlined_call_operand.hbm [shape: f32[16,128], index: 7, kind: output, shape index: {}]
  %s8 = sld [smem:[#allocation0]]
  $region54: #{tpu_custom_call.1} parent=0
    _
  %s10 = ssub.s32 1, %s8
  %s11 = scalar_select 0, %s10, %s8
  $region1: #{tpu_custom_call.1} parent=0
    #allocation2 [shape = 'u8[8192]{0}', space=vmem, size = 0x2000, scoped, tag = 'input window, operand 0, single buffered']
    #allocation3 [shape = 's32[1]{0}', space=sflag, size = 0x4, scoped, tag = 'scoped memory for tpu_custom_call.1']
    #allocation4 [shape = 's32[1]{0}', space=sflag, size = 0x4, scoped, tag = 'scoped memory for tpu_custom_call.1']
    #allocation5 [shape = 'u8[65536]{0}', space=vmem, size = 0x10000, scoped, tag = 'input window, operand 1, single buffered']
    #allocation6 [shape = 's32[1]{0}', space=sflag, size = 0x4, scoped, tag = 'scoped memory for tpu_custom_call.1']
    #allocation7 [shape = 'u8[65536]{0}', space=vmem, size = 0x10000, scoped, tag = 'input window, operand 2, single buffered']
    #allocation8 [shape = 'u8[65536]{0}', space=vmem, size = 0x10000, scoped, tag = 'input window, operand 3, single buffered']
    #allocation9 [shape = 's32[1]{0}', space=sflag, size = 0x4, scoped, tag = 'scoped memory for tpu_custom_call.1']
    #allocation10 [shape = 'u8[8192]{0}', space=vmem, size = 0x2000, scoped, tag = 'output window, operand 0, single buffered']
    %12 = vsyncpa [#allocation3], 0
    %13 = vsyncpa [#allocation6], 0
    %14 = vsyncpa [#allocation9], 0
    %15 = vsyncpa [#allocation4], 0
    // Predicated region
    $region2: #{tpu_custom_call.1} parent=1 // pred_check
      _
    $region3: #{tpu_custom_call.1} parent=1 // pred_check_branch
      %17 = sbr.rel (0) target = $region5
    $region4: #{tpu_custom_call.1} parent=1 // pred_region
      %19 = vsyncadd [#allocation3], 0
      %s20 = sshll.u32 %s0, 4
      %s21 = int_to_ptr.hbm [resolvable:$true] %s20
      %s22 = sshll.u32 [#allocation2], 4
      %s23 = int_to_ptr.vmem [resolvable:$true] %s22
      %28 = dma.hbm_to_vmem [thread:$0]  %s21, 256, %s23, [#allocation3], 128, 128, 8
    $region5: #{tpu_custom_call.1} parent=1 // pred_fallthru
      _
    // Predicated region
    $region6: #{tpu_custom_call.1} parent=1 // pred_check
      _
    $region7: #{tpu_custom_call.1} parent=1 // pred_check_branch
      %30 = sbr.rel (0) target = $region9
    $region8: #{tpu_custom_call.1} parent=1 // pred_region
      %32 = vsyncadd [#allocation6], 0
      %s33 = sshll.u32 %s1, 4
      %s34 = int_to_ptr.hbm [resolvable:$true] %s33
      %s35 = sshll.u32 [#allocation5], 4
      %s36 = int_to_ptr.vmem [resolvable:$true] %s35
      %41 = dma.hbm_to_vmem [thread:$0]  %s34, 2048, %s36, [#allocation6], 128, 128, 8
    $region9: #{tpu_custom_call.1} parent=1 // pred_fallthru
      _
    // Predicated region
    $region10: #{tpu_custom_call.1} parent=1 // pred_check
      _
    $region11: #{tpu_custom_call.1} parent=1 // pred_check_branch
      %43 = sbr.rel (0) target = $region13
    $region12: #{tpu_custom_call.1} parent=1 // pred_region
      %45 = vsyncadd [#allocation6], 0
      %s46 = sshll.u32 %s2, 4
      %s47 = int_to_ptr.hbm [resolvable:$true] %s46
      %s48 = sshll.u32 [#allocation7], 4
      %s49 = int_to_ptr.vmem [resolvable:$true] %s48
      %54 = dma.hbm_to_vmem [thread:$0]  %s47, 2048, %s49, [#allocation6], 128, 128, 8
    $region13: #{tpu_custom_call.1} parent=1 // pred_fallthru
      _
    // Predicated region
    $region14: #{tpu_custom_call.1} parent=1 // pred_check
      _
    $region15: #{tpu_custom_call.1} parent=1 // pred_check_branch
      %56 = sbr.rel (0) target = $region17
    $region16: #{tpu_custom_call.1} parent=1 // pred_region
      %58 = vsyncadd [#allocation9], 0
      %s59 = sshll.u32 %s3, 4
      %s60 = int_to_ptr.hbm [resolvable:$true] %s59
      %s61 = sshll.u32 [#allocation8], 4
      %s62 = int_to_ptr.vmem [resolvable:$true] %s61
      %67 = dma.hbm_to_vmem [thread:$0]  %s60, 2048, %s62, [#allocation9], 128, 128, 8
    $region17: #{tpu_custom_call.1} parent=1 // pred_fallthru
      _
    // Predicated region
    $region18: #{tpu_custom_call.1} parent=1 // pred_check
      _
    $region19: #{tpu_custom_call.1} parent=1 // pred_check_branch
      %69 = sbr.rel (0) target = $region21
    $region20: #{tpu_custom_call.1} parent=1 // pred_region
      _
    $region21: #{tpu_custom_call.1} parent=1 // pred_fallthru
      _
    // Predicated region
    $region22: #{tpu_custom_call.1} parent=1 // pred_check
      _
    $region23: #{tpu_custom_call.1} parent=1 // pred_check_branch
      %71 = sbr.rel (0) target = $region25
    $region24: #{tpu_custom_call.1} parent=1 // pred_region
      _
    $region25: #{tpu_custom_call.1} parent=1 // pred_fallthru
      _
    // Predicated region
    $region26: #{tpu_custom_call.1} parent=1 // pred_check
      _
    $region27: #{tpu_custom_call.1} parent=1 // pred_check_branch
      %73 = sbr.rel (0) target = $region29
    $region28: #{tpu_custom_call.1} parent=1 // pred_region
      _
    $region29: #{tpu_custom_call.1} parent=1 // pred_fallthru
      _
    // Predicated region
    $region30: #{tpu_custom_call.1} parent=1 // pred_check
      _
    $region31: #{tpu_custom_call.1} parent=1 // pred_check_branch
      %75 = sbr.rel (0) target = $region33
    $region32: #{tpu_custom_call.1} parent=1 // pred_region
      %77 = dma.done [#allocation3], 256
    $region33: #{tpu_custom_call.1} parent=1 // pred_fallthru
      _
    // Predicated region
    $region34: #{tpu_custom_call.1} parent=1 // pred_check
      _
    $region35: #{tpu_custom_call.1} parent=1 // pred_check_branch
      %79 = sbr.rel (0) target = $region37
    $region36: #{tpu_custom_call.1} parent=1 // pred_region
      %81 = dma.done [#allocation6], 2048
    $region37: #{tpu_custom_call.1} parent=1 // pred_fallthru
      _
    // Predicated region
    $region38: #{tpu_custom_call.1} parent=1 // pred_check
      _
    $region39: #{tpu_custom_call.1} parent=1 // pred_check_branch
      %83 = sbr.rel (0) target = $region41
    $region40: #{tpu_custom_call.1} parent=1 // pred_region
      %85 = dma.done [#allocation6], 2048
    $region41: #{tpu_custom_call.1} parent=1 // pred_fallthru
      _
    // Predicated region
    $region42: #{tpu_custom_call.1} parent=1 // pred_check
      _
    $region43: #{tpu_custom_call.1} parent=1 // pred_check_branch
      %87 = sbr.rel (0) target = $region45
    $region44: #{tpu_custom_call.1} parent=1 // pred_region
      %89 = dma.done [#allocation9], 2048
    $region45: #{tpu_custom_call.1} parent=1 // pred_fallthru
      _
    %v90 = vld [vmem:[#allocation2] sm:$0xff]
    %v91 = vld [vmem:[#allocation2 + $0x8] sm:$0xff]
    %v92 = vld [vmem:[#allocation5] sm:$0xff]
    %v93 = vld [vmem:[#allocation5 + $0x8] sm:$0xff]
    %v94 = vld [vmem:[#allocation5 + $0x10] sm:$0xff]
    %v95 = vld [vmem:[#allocation5 + $0x18] sm:$0xff]
    %v96 = vld [vmem:[#allocation5 + $0x20] sm:$0xff]
    %v97 = vld [vmem:[#allocation5 + $0x28] sm:$0xff]
    %v98 = vld [vmem:[#allocation5 + $0x30] sm:$0xff]
    %v99 = vld [vmem:[#allocation5 + $0x38] sm:$0xff]
    %v100 = vld [vmem:[#allocation5 + $0x40] sm:$0xff]
    %v101 = vld [vmem:[#allocation5 + $0x48] sm:$0xff]
    %v102 = vld [vmem:[#allocation5 + $0x50] sm:$0xff]
    %v103 = vld [vmem:[#allocation5 + $0x58] sm:$0xff]
    %v104 = vld [vmem:[#allocation5 + $0x60] sm:$0xff]
    %v105 = vld [vmem:[#allocation5 + $0x68] sm:$0xff]
    %v106 = vld [vmem:[#allocation5 + $0x70] sm:$0xff]
    %v107 = vld [vmem:[#allocation5 + $0x78] sm:$0xff]
    %v108 = vld [vmem:[%s4] sm:$0x1]
    %v110 = vperm.slane %v108, 0
    %112 = vmatpush.msra.mxu0 %v107
    %113 = vmatpush.msra.mxu0 %v106
    %114 = vmatpush.msra.mxu0 %v105
    %115 = vmatpush.msra.mxu0 %v104
    %116 = vmatpush.msra.mxu0 %v103
    %117 = vmatpush.msra.mxu0 %v102
    %118 = vmatpush.msra.mxu0 %v101
    %119 = vmatpush.msra.mxu0 %v100
    %120 = vmatpush.msra.mxu0 %v99
    %121 = vmatpush.msra.mxu0 %v98
    %122 = vmatpush.msra.mxu0 %v97
    %123 = vmatpush.msra.mxu0 %v96
    %124 = vmatpush.msra.mxu0 %v95
    %125 = vmatpush.msra.mxu0 %v94
    %126 = vmatpush.msra.mxu0 %v93
    %127 = vmatpush.msra.mxu0 %v92
    %128 = vmatmul.f32.gmra.mxu0 %v90
    %v129 = vpop.f32.mrf.mxu0
    %v130 = vadd.f32 %v110, %v129
    %131 = vmatmul.f32.gmra.mxu0 %v91
    %v132 = vpop.f32.mrf.mxu0
    %v133 = vadd.f32 %v110, %v132
    %134 = vdwg.mxu0
    %v135 = vmax.f32 %v130, 0.0
    %v136 = vmax.f32 %v133, 0.0
    %v137 = vld [vmem:[#allocation7] sm:$0xff]
    %v138 = vld [vmem:[#allocation7 + $0x8] sm:$0xff]
    %v139 = vld [vmem:[#allocation7 + $0x10] sm:$0xff]
    %v140 = vld [vmem:[#allocation7 + $0x18] sm:$0xff]
    %v141 = vld [vmem:[#allocation7 + $0x20] sm:$0xff]
    %v142 = vld [vmem:[#allocation7 + $0x28] sm:$0xff]
    %v143 = vld [vmem:[#allocation7 + $0x30] sm:$0xff]
    %v144 = vld [vmem:[#allocation7 + $0x38] sm:$0xff]
    %v145 = vld [vmem:[#allocation7 + $0x40] sm:$0xff]
    %v146 = vld [vmem:[#allocation7 + $0x48] sm:$0xff]
    %v147 = vld [vmem:[#allocation7 + $0x50] sm:$0xff]
    %v148 = vld [vmem:[#allocation7 + $0x58] sm:$0xff]
    %v149 = vld [vmem:[#allocation7 + $0x60] sm:$0xff]
    %v150 = vld [vmem:[#allocation7 + $0x68] sm:$0xff]
    %v151 = vld [vmem:[#allocation7 + $0x70] sm:$0xff]
    %v152 = vld [vmem:[#allocation7 + $0x78] sm:$0xff]
    %v153 = vld [vmem:[%s5] sm:$0x1]
    %v155 = vperm.slane %v153, 0
    %157 = vmatpush.msra.mxu0 %v152
    %158 = vmatpush.msra.mxu0 %v151
    %159 = vmatpush.msra.mxu0 %v150
    %160 = vmatpush.msra.mxu0 %v149
    %161 = vmatpush.msra.mxu0 %v148
    %162 = vmatpush.msra.mxu0 %v147
    %163 = vmatpush.msra.mxu0 %v146
    %164 = vmatpush.msra.mxu0 %v145
    %165 = vmatpush.msra.mxu0 %v144
    %166 = vmatpush.msra.mxu0 %v143
    %167 = vmatpush.msra.mxu0 %v142
    %168 = vmatpush.msra.mxu0 %v141
    %169 = vmatpush.msra.mxu0 %v140
    %170 = vmatpush.msra.mxu0 %v139
    %171 = vmatpush.msra.mxu0 %v138
    %172 = vmatpush.msra.mxu0 %v137
    %173 = vmatmul.f32.gmra.mxu0 %v135
    %v174 = vpop.f32.mrf.mxu0
    %v175 = vadd.f32 %v155, %v174
    %176 = vmatmul.f32.gmra.mxu0 %v136
    %v177 = vpop.f32.mrf.mxu0
    %v178 = vadd.f32 %v155, %v177
    %179 = vdwg.mxu0
    %v180 = vmax.f32 %v175, 0.0
    %v181 = vmax.f32 %v178, 0.0
    %v182 = vld [vmem:[#allocation8] sm:$0xff]
    %v183 = vld [vmem:[#allocation8 + $0x8] sm:$0xff]
    %v184 = vld [vmem:[#allocation8 + $0x10] sm:$0xff]
    %v185 = vld [vmem:[#allocation8 + $0x18] sm:$0xff]
    %v186 = vld [vmem:[#allocation8 + $0x20] sm:$0xff]
    %v187 = vld [vmem:[#allocation8 + $0x28] sm:$0xff]
    %v188 = vld [vmem:[#allocation8 + $0x30] sm:$0xff]
    %v189 = vld [vmem:[#allocation8 + $0x38] sm:$0xff]
    %v190 = vld [vmem:[#allocation8 + $0x40] sm:$0xff]
    %v191 = vld [vmem:[#allocation8 + $0x48] sm:$0xff]
    %v192 = vld [vmem:[#allocation8 + $0x50] sm:$0xff]
    %v193 = vld [vmem:[#allocation8 + $0x58] sm:$0xff]
    %v194 = vld [vmem:[#allocation8 + $0x60] sm:$0xff]
    %v195 = vld [vmem:[#allocation8 + $0x68] sm:$0xff]
    %v196 = vld [vmem:[#allocation8 + $0x70] sm:$0xff]
    %v197 = vld [vmem:[#allocation8 + $0x78] sm:$0xff]
    %v198 = vld [vmem:[%s6] sm:$0x1]
    %v200 = vperm.slane %v198, 0
    %202 = vmatpush.msra.mxu0 %v197
    %203 = vmatpush.msra.mxu0 %v196
    %204 = vmatpush.msra.mxu0 %v195
    %205 = vmatpush.msra.mxu0 %v194
    %206 = vmatpush.msra.mxu0 %v193
    %207 = vmatpush.msra.mxu0 %v192
    %208 = vmatpush.msra.mxu0 %v191
    %209 = vmatpush.msra.mxu0 %v190
    %210 = vmatpush.msra.mxu0 %v189
    %211 = vmatpush.msra.mxu0 %v188
    %212 = vmatpush.msra.mxu0 %v187
    %213 = vmatpush.msra.mxu0 %v186
    %214 = vmatpush.msra.mxu0 %v185
    %215 = vmatpush.msra.mxu0 %v184
    %216 = vmatpush.msra.mxu0 %v183
    %217 = vmatpush.msra.mxu0 %v182
    %218 = vmatmul.f32.gmra.mxu0 %v180
    %v219 = vpop.f32.mrf.mxu0
    %v220 = vadd.f32 %v200, %v219
    %221 = vmatmul.f32.gmra.mxu0 %v181
    %v222 = vpop.f32.mrf.mxu0
    %v223 = vadd.f32 %v200, %v222
    %224 = vdwg.mxu0
    %225 = vst [vmem:[#allocation10] sm:$0xff] %v220
    %226 = vst [vmem:[#allocation10 + $0x8] sm:$0xff] %v223
    // Predicated region
    $region46: #{tpu_custom_call.1} parent=1 // pred_check
      _
    $region47: #{tpu_custom_call.1} parent=1 // pred_check_branch
      %228 = sbr.rel (0) target = $region49
    $region48: #{tpu_custom_call.1} parent=1 // pred_region
      %230 = vsyncadd [#allocation4], 0
      %s231 = sshll.u32 [#allocation10], 4
      %s232 = int_to_ptr.vmem [resolvable:$true] %s231
      %s233 = sshll.u32 %s7, 4
      %s234 = int_to_ptr.hbm [resolvable:$true] %s233
      %239 = dma.vmem_to_hbm [thread:$0]  %s232, 256, %s234, [#allocation4], 128, 128, 8
    $region49: #{tpu_custom_call.1} parent=1 // pred_fallthru
      _
    // Predicated region
    $region50: #{tpu_custom_call.1} parent=1 // pred_check
      _
    $region51: #{tpu_custom_call.1} parent=1 // pred_check_branch
      %241 = sbr.rel (0) target = $region53
    $region52: #{tpu_custom_call.1} parent=1 // pred_region
      %243 = dma.done [#allocation4], 256
    $region53: #{tpu_custom_call.1} parent=1 // pred_fallthru
      _
    %244 = vsyncpa [#allocation3], 1
    %245 = vsyncpa [#allocation6], 1
    %246 = vsyncpa [#allocation9], 1
    %247 = vsyncpa [#allocation4], 1

</llo_original>
